<compile_context>
chip_gen: v6e
topology: v6e:2x2x1
jax: 0.10.0
libtpu: 0.0.40
codegen_flags: <defaults>
</compile_context>

<pallas_src>
import functools

import jax
import jax.numpy as jnp
from jax.experimental import pallas as pl
from jax.experimental.pallas import tpu as pltpu


def _round_up(n: int, m: int) -> int:
    return ((n + m - 1) // m) * m


def _mlp_kernel(x_ref, w1_ref, w2_ref, w3_ref, bias_ref, b3_ref, o_ref):
    """One (TBP, D*G) tile of G-row-packed inputs through the fused critic MLP."""
    # In-kernel bf16 cast of the streamed activations (no separate XLA pass).
    x = x_ref[...].astype(jnp.bfloat16)          # (TBP, D*G)
    b1 = bias_ref[0:1, :]                        # (1, H*G) f32
    b2 = bias_ref[1:2, :]                        # (1, H*G) f32

    # Layer 1 (block-diagonal): bf16 MXU matmul, f32 accumulate, f32 bias+ReLU.
    h1 = jnp.dot(x, w1_ref[...], preferred_element_type=jnp.float32) + b1
    h1 = jnp.maximum(h1, 0.0)

    # Layer 2 (block-diagonal): same pattern.
    h2 = jnp.dot(h1.astype(jnp.bfloat16), w2_ref[...],
                 preferred_element_type=jnp.float32) + b2
    h2 = jnp.maximum(h2, 0.0)

    # Head: block-diagonal (H*G, G) matmul -> one value per row of the group.
    out = jnp.dot(h2.astype(jnp.bfloat16), w3_ref[...],
                  preferred_element_type=jnp.float32) + b3_ref[0]
    o_ref[...] = out.astype(o_ref.dtype)         # (TBP, G)


def pack_params(params, *, group: int = 8, compute_dtype=jnp.bfloat16):
    """One-time parameter packing (call once per parameter set, outside jit).

    group=8 fills the 256-wide MXU on v6e/v7x; use group=4 on v5e (128-wide).
    """
    w1, b1, w2, b2, w3, b3 = params
    D, H = w1.shape
    eye = jnp.eye(group, dtype=jnp.float32)
    w1bd = jnp.kron(eye, w1.astype(jnp.float32)).astype(compute_dtype)   # (D*G, H*G)
    w2bd = jnp.kron(eye, w2.astype(jnp.float32)).astype(compute_dtype)   # (H*G, H*G)
    w3bd = jnp.kron(eye, w3.reshape(H, 1).astype(jnp.float32)
                    ).astype(compute_dtype)                              # (H*G, G)
    biases = jnp.concatenate(
        [jnp.tile(jnp.reshape(b1, (1, H)), (1, group)),
         jnp.tile(jnp.reshape(b2, (1, H)), (1, group))], axis=0
    ).astype(jnp.float32)                                                # (2, H*G)
    b3s = jnp.reshape(b3, (1,)).astype(jnp.float32)                      # SMEM scalar
    return (w1bd, w2bd, w3bd, biases, b3s)


@functools.partial(jax.jit, static_argnames=("block_rows",))
def a2c_value_forward(x, packed, *, block_rows: int = 16384):
    """Forward pass of A2C_value. x: (B, D_in) -> (B, 1) float32."""
    w1bd, w2bd, w3bd, biases, b3s = packed
    B, D = x.shape
    G = w3bd.shape[1]
    DG, HG = w1bd.shape
    assert DG == D * G, (DG, D, G)

    # Pad the batch to a multiple of 8*G (<= 8*G-1 extra rows) so the packed
    # view (B/G, D*G) exists and its sublane dim is 8-aligned.  This is the
    # only pre-pass over x; the bf16 cast happens inside the kernel.
    bp = _round_up(B, 8 * G)
    xin = x.astype(jnp.float32)        # mirrors x.float(); no-op for f32 inputs
    if bp != B:
        xin = jnp.pad(xin, ((0, bp - B), (0, 0)))
    n_packed = bp // G
    xg = xin.reshape(n_packed, DG)     # free row-major view: G rows per packed row

    # Packed-row tile: as large as block_rows allows (amortize ~0.35us/step),
    # capped at ceil(Np/2) so there are >= 2 grid steps for the v7x megacore.
    tbp = max(8, min(_round_up(block_rows, 8 * G) // G,
                     _round_up(pl.cdiv(n_packed, 2), 8)))
    grid = (pl.cdiv(n_packed, tbp),)   # ragged last tile; OOB rows are discarded

    out = pl.pallas_call(
        _mlp_kernel,
        out_shape=jax.ShapeDtypeStruct((n_packed, G), jnp.float32),
        grid=grid,
        in_specs=[
            pl.BlockSpec((tbp, DG), lambda i: (i, 0)),            # x: streamed tiles
            pl.BlockSpec((DG, HG), lambda i: (0, 0)),             # W1 block-diag: resident
            pl.BlockSpec((HG, HG), lambda i: (0, 0)),             # W2 block-diag: resident
            pl.BlockSpec((HG, G), lambda i: (0, 0)),              # W3 block-diag: resident
            pl.BlockSpec((2, HG), lambda i: (0, 0)),              # [b1; b2] tiled: resident
            pl.BlockSpec(memory_space=pltpu.MemorySpace.SMEM),    # b3 scalar
        ],
        out_specs=pl.BlockSpec((tbp, G), lambda i: (i, 0)),
        compiler_params=pltpu.CompilerParams(
            dimension_semantics=("parallel",),       # megacore batch split (v7x)
            vmem_limit_bytes=32 * 1024 * 1024,
        ),
    )(xg, w1bd, w2bd, w3bd, biases, b3s)

    # (B/G, G) row-major is exactly the original row order; reshape is free.
    return out.reshape(bp, 1)[:B]


def init_params(key, input_dim, hidden=32):
    """PyTorch-style init: U(-1/sqrt(fan_in), 1/sqrt(fan_in)).
    Weights stored as (in, out) — i.e. already transposed vs. nn.Linear."""
    ks = jax.random.split(key, 6)

    def linear(kw, kb, fan_in, fan_out):
        bound = 1.0 / jnp.sqrt(jnp.float32(fan_in))
        w = jax.random.uniform(kw, (fan_in, fan_out), jnp.float32, -bound, bound)
        b = jax.random.uniform(kb, (1, fan_out), jnp.float32, -bound, bound)
        return w, b

    w1, b1 = linear(ks[0], ks[1], input_dim, hidden)
    w2, b2 = linear(ks[2], ks[3], hidden, hidden)
    w3, b3 = linear(ks[4], ks[5], hidden, 1)
    return (w1, b1, w2, b2, w3, b3)


if __name__ == "__main__":
    key = jax.random.PRNGKey(0)
    k_x, k_p = jax.random.split(key)

    B, D_IN = 200, 24            # BipedalWalker observation dim = 24
    x = jax.random.normal(k_x, (B, D_IN), dtype=jnp.float32)
    params = init_params(k_p, D_IN)
    packed = pack_params(params, group=8)    # group=4 recommended on v5e

    out = jax.block_until_ready(a2c_value_forward(x, packed))
    assert out.shape == (B, 1)

    # Pure-JAX reference with the same bf16 matmul casts as the kernel.
    w1, b1, w2, b2, w3, b3 = params

    def ref_fn(xr):
        h = jnp.maximum(jnp.dot(xr.astype(jnp.bfloat16), w1.astype(jnp.bfloat16),
                                preferred_element_type=jnp.float32) + b1, 0.0)
        h = jnp.maximum(jnp.dot(h.astype(jnp.bfloat16), w2.astype(jnp.bfloat16),
                                preferred_element_type=jnp.float32) + b2, 0.0)
        return jnp.dot(h.astype(jnp.bfloat16), w3.astype(jnp.bfloat16),
                       preferred_element_type=jnp.float32) + b3

    ref = ref_fn(x)
    assert jnp.allclose(out, ref, atol=1e-2, rtol=1e-2), \
        float(jnp.max(jnp.abs(out - ref)))

    # Tiny per-env-step batch (padded, single-grid-step path).
    out8 = jax.block_until_ready(a2c_value_forward(x[:8], packed))
    assert out8.shape == (8, 1)
    assert jnp.allclose(out8, ref[:8], atol=1e-2, rtol=1e-2)

    # Ragged last grid tile + batch not a multiple of the group size.
    B2 = 713
    x2 = jax.random.normal(jax.random.PRNGKey(1), (B2, D_IN), dtype=jnp.float32)
    out2 = jax.block_until_ready(a2c_value_forward(x2, packed, block_rows=320))
    assert out2.shape == (B2, 1)
    ref2 = ref_fn(x2)
    assert jnp.allclose(out2, ref2, atol=1e-2, rtol=1e-2), \
        float(jnp.max(jnp.abs(out2 - ref2)))

    print("KERNEL_OK")
</pallas_src>

<mosaic_0001>
module attributes {stable_mosaic.version = 11 : i64} {
  func.func @_mlp_kernel(%arg0: i32, %arg1: memref<16x192xf32, #tpu.memory_space<vmem>>, %arg2: memref<192x256xbf16, #tpu.memory_space<vmem>>, %arg3: memref<256x256xbf16, #tpu.memory_space<vmem>>, %arg4: memref<256x8xbf16, #tpu.memory_space<vmem>>, %arg5: memref<2x256xf32, #tpu.memory_space<vmem>>, %arg6: memref<1xf32, #tpu.memory_space<smem>>, %arg7: memref<16x8xf32, #tpu.memory_space<vmem>>) attributes {dimension_semantics = [#tpu.dimension_semantics<parallel>], iteration_bounds = array<i64: 2>, scalar_prefetch = 0 : i64, scratch_operands = 0 : i64, tpu.core_type = #tpu.core_type<tc>, window_params = [{transform_indices = @transform_0, window_bounds = array<i64: 16, 192>}, {pipeline_mode = #tpu.pipeline_mode<synchronous>, transform_indices = @transform_1, window_bounds = array<i64: 192, 256>}, {pipeline_mode = #tpu.pipeline_mode<synchronous>, transform_indices = @transform_2, window_bounds = array<i64: 256, 256>}, {pipeline_mode = #tpu.pipeline_mode<synchronous>, transform_indices = @transform_3, window_bounds = array<i64: 256, 8>}, {pipeline_mode = #tpu.pipeline_mode<synchronous>, transform_indices = @transform_4, window_bounds = array<i64: 2, 256>}, {transform_indices = @transform_5, window_bounds = array<i64: 1>}, {transform_indices = @transform_6, window_bounds = array<i64: 16, 8>}]} {
    %c0 = arith.constant 0 : index
    %c0_0 = arith.constant 0 : index
    %0 = vector.load %arg1[%c0, %c0_0] : memref<16x192xf32, #tpu.memory_space<vmem>>, vector<16x192xf32>
    %1 = arith.truncf %0 : vector<16x192xf32> to vector<16x192xbf16>
    %c0_1 = arith.constant 0 : index
    %c0_2 = arith.constant 0 : index
    %2 = vector.load %arg5[%c0_1, %c0_2] : memref<2x256xf32, #tpu.memory_space<vmem>>, vector<1x256xf32>
    %c1 = arith.constant 1 : index
    %c0_3 = arith.constant 0 : index
    %3 = vector.load %arg5[%c1, %c0_3] : memref<2x256xf32, #tpu.memory_space<vmem>>, vector<1x256xf32>
    %c0_4 = arith.constant 0 : index
    %c0_5 = arith.constant 0 : index
    %4 = vector.load %arg2[%c0_4, %c0_5] : memref<192x256xbf16, #tpu.memory_space<vmem>>, vector<192x256xbf16>
    %cst = arith.constant dense<0.000000e+00> : vector<16x256xf32>
    %5 = tpu.matmul %1, %4, %cst {dimension_numbers = #tpu.dot_dimension_numbers<[1], [0], [0], [1], [0, 0, 1, 1], [], []>} : vector<16x192xbf16>, vector<192x256xbf16>, vector<16x256xf32> -> vector<16x256xf32>
    %6 = vector.broadcast %2 : vector<1x256xf32> to vector<16x256xf32>
    %7 = arith.addf %5, %6 : vector<16x256xf32>
    %cst_6 = arith.constant 0.000000e+00 : f32
    %8 = vector.broadcast %cst_6 : f32 to vector<16x256xf32>
    %9 = arith.maximumf %7, %8 : vector<16x256xf32>
    %10 = arith.truncf %9 : vector<16x256xf32> to vector<16x256xbf16>
    %c0_7 = arith.constant 0 : index
    %c0_8 = arith.constant 0 : index
    %11 = vector.load %arg3[%c0_7, %c0_8] : memref<256x256xbf16, #tpu.memory_space<vmem>>, vector<256x256xbf16>
    %cst_9 = arith.constant dense<0.000000e+00> : vector<16x256xf32>
    %12 = tpu.matmul %10, %11, %cst_9 {dimension_numbers = #tpu.dot_dimension_numbers<[1], [0], [0], [1], [0, 0, 1, 1], [], []>} : vector<16x256xbf16>, vector<256x256xbf16>, vector<16x256xf32> -> vector<16x256xf32>
    %13 = vector.broadcast %3 : vector<1x256xf32> to vector<16x256xf32>
    %14 = arith.addf %12, %13 : vector<16x256xf32>
    %cst_10 = arith.constant 0.000000e+00 : f32
    %15 = vector.broadcast %cst_10 : f32 to vector<16x256xf32>
    %16 = arith.maximumf %14, %15 : vector<16x256xf32>
    %17 = arith.truncf %16 : vector<16x256xf32> to vector<16x256xbf16>
    %c0_11 = arith.constant 0 : index
    %c0_12 = arith.constant 0 : index
    %18 = vector.load %arg4[%c0_11, %c0_12] : memref<256x8xbf16, #tpu.memory_space<vmem>>, vector<256x8xbf16>
    %cst_13 = arith.constant dense<0.000000e+00> : vector<16x8xf32>
    %19 = tpu.matmul %17, %18, %cst_13 {dimension_numbers = #tpu.dot_dimension_numbers<[1], [0], [0], [1], [0, 0, 1, 1], [], []>} : vector<16x256xbf16>, vector<256x8xbf16>, vector<16x8xf32> -> vector<16x8xf32>
    %c0_14 = arith.constant 0 : index
    %20 = memref.load %arg6[%c0_14] : memref<1xf32, #tpu.memory_space<smem>>
    %21 = vector.broadcast %20 : f32 to vector<16x8xf32>
    %22 = arith.addf %19, %21 : vector<16x8xf32>
    %c0_15 = arith.constant 0 : index
    %c0_16 = arith.constant 0 : index
    %23 = vector.load %arg7[%c0_15, %c0_16] : memref<16x8xf32, #tpu.memory_space<vmem>>, vector<16x8xf32>
    tpu.vector_store %arg7[%c0_15, %c0_16], %22 {strides = array<i32>} : memref<16x8xf32, #tpu.memory_space<vmem>>, vector<16x8xf32>,
    return
  }
  func.func @transform_0(%arg0: i32) -> (i32, i32) {
    %c0_i32 = arith.constant 0 : i32
    %c0_i32_0 = arith.constant 0 : i32
    return %arg0, %c0_i32 : i32, i32
  }
  func.func @transform_1(%arg0: i32) -> (i32, i32) {
    %c0_i32 = arith.constant 0 : i32
    %c0_i32_0 = arith.constant 0 : i32
    %c0_i32_1 = arith.constant 0 : i32
    return %c0_i32, %c0_i32_0 : i32, i32
  }
  func.func @transform_2(%arg0: i32) -> (i32, i32) {
    %c0_i32 = arith.constant 0 : i32
    %c0_i32_0 = arith.constant 0 : i32
    %c0_i32_1 = arith.constant 0 : i32
    return %c0_i32, %c0_i32_0 : i32, i32
  }
  func.func @transform_3(%arg0: i32) -> (i32, i32) {
    %c0_i32 = arith.constant 0 : i32
    %c0_i32_0 = arith.constant 0 : i32
    %c0_i32_1 = arith.constant 0 : i32
    return %c0_i32, %c0_i32_0 : i32, i32
  }
  func.func @transform_4(%arg0: i32) -> (i32, i32) {
    %c0_i32 = arith.constant 0 : i32
    %c0_i32_0 = arith.constant 0 : i32
    %c0_i32_1 = arith.constant 0 : i32
    return %c0_i32, %c0_i32_0 : i32, i32
  }
  func.func @transform_5(%arg0: i32) -> i32 {
    %c0_i32 = arith.constant 0 : i32
    %c0_i32_0 = arith.constant 0 : i32
    return %c0_i32 : i32
  }
  func.func @transform_6(%arg0: i32) -> (i32, i32) {
    %c0_i32 = arith.constant 0 : i32
    %c0_i32_0 = arith.constant 0 : i32
    return %arg0, %c0_i32 : i32, i32
  }
}

</mosaic_0001>

<llo_original>
// kernel: a2c_value_forward.1
$region0: #{a2c_value_forward.1}
  #allocation0 [shape = 'u32[]', space=smem, size = 0x4, offset = 0x4, fixed_abs, tag = 'smem constant byte address 0x4 - core index']
  #allocation1 [shape = 'u32[144,128]{1,0:T(1,128)}', space=vmem, size = 0x12000, scoped, tag = 'internal scratch']
  #allocation2 [shape = 'f32[1]{0:T(128)S(6)}', space=smem, size = 0x200, scoped, tag = 'scoped memory for a2c_value_forward.1']
  %s0 = inlined_call_operand.vmem [shape: f32[32,192], index: 0, kind: input, shape index: {}]
  %s1 = inlined_call_operand.vmem [shape: bf16[192,256], index: 1, kind: input, shape index: {}]
  %s2 = inlined_call_operand.vmem [shape: bf16[256,256], index: 2, kind: input, shape index: {}]
  %s3 = inlined_call_operand.vmem [shape: bf16[256,8], index: 3, kind: input, shape index: {}]
  %s4 = inlined_call_operand.vmem [shape: f32[2,256], index: 4, kind: input, shape index: {}]
  %s5 = inlined_call_operand.<no memory space> [shape: f32[1], index: 5, kind: input, shape index: {}]
  %s6 = inlined_call_operand.vmem [shape: f32[32,8], index: 6, kind: output, shape index: {}]
  %s7 = sld [smem:[#allocation0]]
  $region57: #{a2c_value_forward.1} parent=0
    _
  %s9 = ssub.s32 1, %s7
  %s10 = scalar_select 0, %s9, %s7
  %11 = sst [smem:[#allocation2]] %s5
  loop: start=0, step=1, limit=4
  $region2: #{a2c_value_forward.1} parent=0 // loop_pre_header
    _
  $region3: #{a2c_value_forward.1} parent=0 // loop_header
    %s13 = sphi 0, %s17
    %p14 = scmp.ge.s32.totalorder %s13, 4
    %s23 = sphi 0, %s25
    %s26 = sphi 0, %s23
    %s27 = sphi 0, %s26
    %s43 = sphi 0, %s27
    %s47 = sphi 0, %s47
    %s49 = sphi 0, %s47
    %s50 = sphi 0, %s49
    %s64 = sphi 0, %s50
    %s68 = sphi 0, %s68
    %s70 = sphi 0, %s68
    %s71 = sphi 0, %s70
    %s85 = sphi 0, %s71
    %s89 = sphi 0, %s89
    %s91 = sphi 0, %s89
    %s92 = sphi 0, %s91
    %s106 = sphi 0, %s92
    %s110 = sphi 0, %s110
    %s112 = sphi 0, %s110
    %s113 = sphi 0, %s112
    %s127 = sphi 0, %s113
    %s131 = sphi 0, %s131
    %s133 = sphi 0, %s131
    %s134 = sphi 0, %s133
    %s148 = sphi 0, %s134
    %s154 = sphi 0, %s156
    %s157 = sphi 0, %s154
    %s158 = sphi 0, %s157
    %s174 = sphi 0, %s158
  $region4: #{a2c_value_forward.1} parent=0 // loop_header_branch
    %16 = sbr.rel (%p14) target = $region8
  $region5: #{a2c_value_forward.1} parent=0 // loop_body
    %s18 = ssub.s32 %s13, 1
    %s19 = ssub.s32 %s13, 2
    %s20 = sadd.s32 %s13, 1
    %s21 = ssub.s32 %s13, %s20
    %p22 = scmp.eq.s32.totalorder %s21, 0
    %s24 = sadd.s32 %s23, 1
    %s25 = scalar_select %p22, %s23, %s24
    %p28 = pneg %p22
    %p29 = scmp.eq.s32.totalorder %s13, 1
    %p30 = por %p28, %p29
    %p31 = scmp.ne.s32.totalorder %s23, %s26
    %p32 = scmp.eq.s32.totalorder %s13, 0
    %p33 = por %p31, %p32
    %p34 = scmp.ne.s32.totalorder %s23, %s26
    %p35 = scmp.eq.s32.totalorder %s18, 1
    %p36 = por %p34, %p35
    %p37 = scmp.ne.s32.totalorder %s26, %s27
    %p38 = scmp.eq.s32.totalorder %s18, 0
    %p39 = por %p37, %p38
    %p40 = scmp.ne.s32.totalorder %s26, %s27
    %p41 = scmp.eq.s32.totalorder %s19, 1
    %p42 = por %p40, %p41
    %p44 = scmp.ne.s32.totalorder %s27, %s43
    %p45 = scmp.eq.s32.totalorder %s19, 0
    %p46 = por %p44, %p45
    %s48 = sadd.s32 %s47, 1
    %p51 = scmp.eq.s32.totalorder %s13, 1
    %p52 = scmp.ne.s32.totalorder %s47, %s49
    %p53 = scmp.eq.s32.totalorder %s13, 0
    %p54 = por %p52, %p53
    %p55 = scmp.ne.s32.totalorder %s47, %s49
    %p56 = scmp.eq.s32.totalorder %s18, 1
    %p57 = por %p55, %p56
    %p58 = scmp.ne.s32.totalorder %s49, %s50
    %p59 = scmp.eq.s32.totalorder %s18, 0
    %p60 = por %p58, %p59
    %p61 = scmp.ne.s32.totalorder %s49, %s50
    %p62 = scmp.eq.s32.totalorder %s19, 1
    %p63 = por %p61, %p62
    %p65 = scmp.ne.s32.totalorder %s50, %s64
    %p66 = scmp.eq.s32.totalorder %s19, 0
    %p67 = por %p65, %p66
    %s69 = sadd.s32 %s68, 1
    %p72 = scmp.eq.s32.totalorder %s13, 1
    %p73 = scmp.ne.s32.totalorder %s68, %s70
    %p74 = scmp.eq.s32.totalorder %s13, 0
    %p75 = por %p73, %p74
    %p76 = scmp.ne.s32.totalorder %s68, %s70
    %p77 = scmp.eq.s32.totalorder %s18, 1
    %p78 = por %p76, %p77
    %p79 = scmp.ne.s32.totalorder %s70, %s71
    %p80 = scmp.eq.s32.totalorder %s18, 0
    %p81 = por %p79, %p80
    %p82 = scmp.ne.s32.totalorder %s70, %s71
    %p83 = scmp.eq.s32.totalorder %s19, 1
    %p84 = por %p82, %p83
    %p86 = scmp.ne.s32.totalorder %s71, %s85
    %p87 = scmp.eq.s32.totalorder %s19, 0
    %p88 = por %p86, %p87
    %s90 = sadd.s32 %s89, 1
    %p93 = scmp.eq.s32.totalorder %s13, 1
    %p94 = scmp.ne.s32.totalorder %s89, %s91
    %p95 = scmp.eq.s32.totalorder %s13, 0
    %p96 = por %p94, %p95
    %p97 = scmp.ne.s32.totalorder %s89, %s91
    %p98 = scmp.eq.s32.totalorder %s18, 1
    %p99 = por %p97, %p98
    %p100 = scmp.ne.s32.totalorder %s91, %s92
    %p101 = scmp.eq.s32.totalorder %s18, 0
    %p102 = por %p100, %p101
    %p103 = scmp.ne.s32.totalorder %s91, %s92
    %p104 = scmp.eq.s32.totalorder %s19, 1
    %p105 = por %p103, %p104
    %p107 = scmp.ne.s32.totalorder %s92, %s106
    %p108 = scmp.eq.s32.totalorder %s19, 0
    %p109 = por %p107, %p108
    %s111 = sadd.s32 %s110, 1
    %p114 = scmp.eq.s32.totalorder %s13, 1
    %p115 = scmp.ne.s32.totalorder %s110, %s112
    %p116 = scmp.eq.s32.totalorder %s13, 0
    %p117 = por %p115, %p116
    %p118 = scmp.ne.s32.totalorder %s110, %s112
    %p119 = scmp.eq.s32.totalorder %s18, 1
    %p120 = por %p118, %p119
    %p121 = scmp.ne.s32.totalorder %s112, %s113
    %p122 = scmp.eq.s32.totalorder %s18, 0
    %p123 = por %p121, %p122
    %p124 = scmp.ne.s32.totalorder %s112, %s113
    %p125 = scmp.eq.s32.totalorder %s19, 1
    %p126 = por %p124, %p125
    %p128 = scmp.ne.s32.totalorder %s113, %s127
    %p129 = scmp.eq.s32.totalorder %s19, 0
    %p130 = por %p128, %p129
    %s132 = sadd.s32 %s131, 1
    %p135 = scmp.eq.s32.totalorder %s13, 1
    %p136 = scmp.ne.s32.totalorder %s131, %s133
    %p137 = scmp.eq.s32.totalorder %s13, 0
    %p138 = por %p136, %p137
    %p139 = scmp.ne.s32.totalorder %s131, %s133
    %p140 = scmp.eq.s32.totalorder %s18, 1
    %p141 = por %p139, %p140
    %p142 = scmp.ne.s32.totalorder %s133, %s134
    %p143 = scmp.eq.s32.totalorder %s18, 0
    %p144 = por %p142, %p143
    %p145 = scmp.ne.s32.totalorder %s133, %s134
    %p146 = scmp.eq.s32.totalorder %s19, 1
    %p147 = por %p145, %p146
    %p149 = scmp.ne.s32.totalorder %s134, %s148
    %p150 = scmp.eq.s32.totalorder %s19, 0
    %p151 = por %p149, %p150
    %s152 = ssub.s32 %s13, %s20
    %p153 = scmp.eq.s32.totalorder %s152, 0
    %s155 = sadd.s32 %s154, 1
    %s156 = scalar_select %p153, %s154, %s155
    %p159 = pneg %p153
    %p160 = scmp.eq.s32.totalorder %s13, 1
    %p161 = por %p159, %p160
    %p162 = scmp.ne.s32.totalorder %s154, %s157
    %p163 = scmp.eq.s32.totalorder %s13, 0
    %p164 = por %p162, %p163
    %p165 = scmp.ne.s32.totalorder %s154, %s157
    %p166 = scmp.eq.s32.totalorder %s18, 1
    %p167 = por %p165, %p166
    %p168 = scmp.ne.s32.totalorder %s157, %s158
    %p169 = scmp.eq.s32.totalorder %s18, 0
    %p170 = por %p168, %p169
    %p171 = scmp.ne.s32.totalorder %s157, %s158
    %p172 = scmp.eq.s32.totalorder %s19, 1
    %p173 = por %p171, %p172
    %p175 = scmp.ne.s32.totalorder %s158, %s174
    %p176 = scmp.eq.s32.totalorder %s19, 0
    %p177 = por %p175, %p176
    %p178 = scmp.le.s32.totalorder 1, %s13
    %p179 = scmp.lt.s32.totalorder %s13, 3
    %p180 = pnand %p178, %p179
    %p181 = pneg %p180
    // Predicated region
    $region9: #{a2c_value_forward.1} parent=5 // pred_check
      _
    $region10: #{a2c_value_forward.1} parent=5 // pred_check_branch
      %183 = sbr.rel (%p180) target = $region12
    $region11: #{a2c_value_forward.1} parent=5 // pred_region
      %s184 = ssub.s32 %s13, 1
      // Predicated region
      $region13: #{a2c_value_forward.1} parent=11 // pred_check
        %p185 = pneg %p60
      $region14: #{a2c_value_forward.1} parent=11 // pred_check_branch
        %187 = sbr.rel (%p185) target = $region16
      $region15: #{a2c_value_forward.1} parent=11 // pred_region
        _
      $region16: #{a2c_value_forward.1} parent=11 // pred_fallthru
        _
      // Predicated region
      $region17: #{a2c_value_forward.1} parent=11 // pred_check
        %p188 = pneg %p81
      $region18: #{a2c_value_forward.1} parent=11 // pred_check_branch
        %190 = sbr.rel (%p188) target = $region20
      $region19: #{a2c_value_forward.1} parent=11 // pred_region
        _
      $region20: #{a2c_value_forward.1} parent=11 // pred_fallthru
        _
      // Predicated region
      $region21: #{a2c_value_forward.1} parent=11 // pred_check
        %p191 = pneg %p102
      $region22: #{a2c_value_forward.1} parent=11 // pred_check_branch
        %193 = sbr.rel (%p191) target = $region24
      $region23: #{a2c_value_forward.1} parent=11 // pred_region
        _
      $region24: #{a2c_value_forward.1} parent=11 // pred_fallthru
        _
      // Predicated region
      $region25: #{a2c_value_forward.1} parent=11 // pred_check
        %p194 = pneg %p123
      $region26: #{a2c_value_forward.1} parent=11 // pred_check_branch
        %196 = sbr.rel (%p194) target = $region28
      $region27: #{a2c_value_forward.1} parent=11 // pred_region
        _
      $region28: #{a2c_value_forward.1} parent=11 // pred_fallthru
        _
      // Predicated region
      $region29: #{a2c_value_forward.1} parent=11 // pred_check
        %p197 = pneg %p144
      $region30: #{a2c_value_forward.1} parent=11 // pred_check_branch
        %199 = sbr.rel (%p197) target = $region32
      $region31: #{a2c_value_forward.1} parent=11 // pred_region
        _
      $region32: #{a2c_value_forward.1} parent=11 // pred_fallthru
        _
    $region12: #{a2c_value_forward.1} parent=5 // pred_fallthru
      _
    %p200 = scmp.lt.s32.totalorder %s13, 2
    // Predicated region
    $region33: #{a2c_value_forward.1} parent=5 // pred_check
      %p201 = pneg %p200
    $region34: #{a2c_value_forward.1} parent=5 // pred_check_branch
      %203 = sbr.rel (%p201) target = $region36
    $region35: #{a2c_value_forward.1} parent=5 // pred_region
      // Predicated region
      $region37: #{a2c_value_forward.1} parent=35 // pred_check
        %p204 = pneg %p33
      $region38: #{a2c_value_forward.1} parent=35 // pred_check_branch
        %206 = sbr.rel (%p204) target = $region40
      $region39: #{a2c_value_forward.1} parent=35 // pred_region
        %s207 = smul.u32 2, %s13
        %p208 = scmp.lt.s32.totalorder %s207, 3
        %s209 = scalar_select %p208, %s207, 3
        %s210 = smul.addr %s209, 2
        %s211 = smul.addr %s210, 8
        %s212 = scalar_lea.vmem %s0, %s211
        %s213 = smul.u32 2, %s13
      $region40: #{a2c_value_forward.1} parent=35 // pred_fallthru
        _
    $region36: #{a2c_value_forward.1} parent=5 // pred_fallthru
      _
    %p214 = scmp.le.s32.totalorder 1, %s13
    %p215 = scmp.lt.s32.totalorder %s13, 3
    %p216 = pnand %p214, %p215
    %p217 = pneg %p216
    // Predicated region
    $region41: #{a2c_value_forward.1} parent=5 // pred_check
      _
    $region42: #{a2c_value_forward.1} parent=5 // pred_check_branch
      %219 = sbr.rel (%p216) target = $region44
    $region43: #{a2c_value_forward.1} parent=5 // pred_region
      %s220 = ssub.s32 %s13, 1
      %s221 = smul.u32 2, %s18
      %p222 = scmp.lt.s32.totalorder %s221, 3
      %s223 = scalar_select %p222, %s221, 3
      %s224 = smul.addr %s223, 2
      %s225 = smul.addr %s224, 8
      %s226 = scalar_lea.vmem %s0, %s225
      %p227 = pneg %p39
      %p228 = pneg %p36
      %p229 = pneg %p60
      %p230 = pneg %p57
      %p231 = pneg %p81
      %p232 = pneg %p78
      %p233 = pneg %p102
      %p234 = pneg %p99
      %p235 = pneg %p123
      %p236 = pneg %p120
      %p237 = pneg %p144
      %p238 = pneg %p141
      %p239 = pneg %p170
      %p240 = pneg %p167
      %s241 = smul.u32 2, %s18
      %p242 = scmp.lt.s32.totalorder %s241, 3
      %s243 = scalar_select %p242, %s241, 3
      %s244 = smul.addr %s243, 8
      %s245 = scalar_lea.vmem %s6, %s244
      %s246 = smul.u32 2, %s18
      %p247 = scmp.lt.s32.totalorder %s246, 3
      %s248 = scalar_select %p247, %s246, 3
      %s249 = smul.addr %s248, 2
      %s250 = smul.addr %s249, 8
      %s251 = scalar_lea.vmem %s0, %s250
      %s252 = smul.u32 2, %s18
      %s253 = smul.u32 2, %s18
      %p254 = scmp.lt.s32.totalorder %s253, 3
      %s255 = scalar_select %p254, %s253, 3
      %s256 = smul.addr %s255, 8
      %s257 = scalar_lea.vmem %s6, %s256
      %s258 = smul.u32 2, %s18
      %v260 = vld [vmem:[%s251] sm:$0xff]
      %v261 = vld [vmem:[%s251 + $0x8] sm:$0xff]
      %v262 = vld [vmem:[%s251 + $0x10] sm:$0xff]
      %v263 = vld [vmem:[%s251 + $0x18] sm:$0xff]
      %v264 = vpack.c.bf16 %v262, %v260
      %v265 = vpack.c.bf16 %v263, %v261
      %v266 = vld [vmem:[%s4] ss:$2 sm:$0x3]
      %s267 = scalar_lea.vmem %s4, 1
      %v268 = vld [vmem:[%s267] ss:$2 sm:$0x3]
      %v269 = vld [vmem:[%s1] sm:$0xff]
      %v270 = vld [vmem:[%s1 + $0x8] sm:$0xff]
      %v271 = vld [vmem:[%s1 + $0x10] sm:$0xff]
      %v272 = vld [vmem:[%s1 + $0x18] sm:$0xff]
      %v273 = vld [vmem:[%s1 + $0x20] sm:$0xff]
      %v274 = vld [vmem:[%s1 + $0x28] sm:$0xff]
      %v275 = vld [vmem:[%s1 + $0x30] sm:$0xff]
      %v276 = vld [vmem:[%s1 + $0x38] sm:$0xff]
      %v277 = vld [vmem:[%s1 + $0x40] sm:$0xff]
      %v278 = vld [vmem:[%s1 + $0x48] sm:$0xff]
      %v279 = vld [vmem:[%s1 + $0x50] sm:$0xff]
      %v280 = vld [vmem:[%s1 + $0x58] sm:$0xff]
      %v281 = vld [vmem:[%s1 + $0x60] sm:$0xff]
      %v282 = vld [vmem:[%s1 + $0x68] sm:$0xff]
      %v283 = vld [vmem:[%s1 + $0x70] sm:$0xff]
      %v284 = vld [vmem:[%s1 + $0x78] sm:$0xff]
      %v285 = vld [vmem:[%s1 + $0x80] sm:$0xff]
      %v286 = vld [vmem:[%s1 + $0x88] sm:$0xff]
      %v287 = vld [vmem:[%s1 + $0x90] sm:$0xff]
      %v288 = vld [vmem:[%s1 + $0x98] sm:$0xff]
      %v289 = vld [vmem:[%s1 + $0xa0] sm:$0xff]
      %v290 = vld [vmem:[%s1 + $0xa8] sm:$0xff]
      %v291 = vld [vmem:[%s1 + $0xb0] sm:$0xff]
      %v292 = vld [vmem:[%s1 + $0xb8] sm:$0xff]
      %v294 = vlaneseq
      %v295 = vshrl.u32 %v294, 7
      %v296 = vsub.s32 0, %v295
      %v297 = vrot.slane %v266, %v296
      %v298 = vlaneseq
      %v299 = vshrl.u32 %v298, 7
      %v300 = vsub.s32 1, %v299
      %v301 = vrot.slane %v266, %v300
      %v328 = vunpack.c.l.b16 %v269
      %v329 = vunpack.c.h.b16 %v269
      %v330 = vunpack.c.l.b16 %v270
      %v331 = vunpack.c.h.b16 %v270
      %v332 = vunpack.c.l.b16 %v271
      %v333 = vunpack.c.h.b16 %v271
      %v334 = vunpack.c.l.b16 %v272
      %v335 = vunpack.c.h.b16 %v272
      %v336 = vunpack.c.l.b16 %v273
      %v337 = vunpack.c.h.b16 %v273
      %v338 = vunpack.c.l.b16 %v274
      %v339 = vunpack.c.h.b16 %v274
      %v340 = vunpack.c.l.b16 %v275
      %v341 = vunpack.c.h.b16 %v275
      %v342 = vunpack.c.l.b16 %v276
      %v343 = vunpack.c.h.b16 %v276
      %v344 = vunpack.c.l.b16 %v277
      %v345 = vunpack.c.h.b16 %v277
      %v346 = vunpack.c.l.b16 %v278
      %v347 = vunpack.c.h.b16 %v278
      %v348 = vunpack.c.l.b16 %v279
      %v349 = vunpack.c.h.b16 %v279
      %v350 = vunpack.c.l.b16 %v280
      %v351 = vunpack.c.h.b16 %v280
      %v352 = vunpack.c.l.b16 %v281
      %v353 = vunpack.c.h.b16 %v281
      %v354 = vunpack.c.l.b16 %v282
      %v355 = vunpack.c.h.b16 %v282
      %v356 = vunpack.c.l.b16 %v283
      %v357 = vunpack.c.h.b16 %v283
      %v358 = vunpack.c.l.b16 %v284
      %v359 = vunpack.c.h.b16 %v284
      %v360 = vunpack.c.l.b16 %v285
      %v361 = vunpack.c.h.b16 %v285
      %v362 = vunpack.c.l.b16 %v286
      %v363 = vunpack.c.h.b16 %v286
      %v364 = vunpack.c.l.b16 %v287
      %v365 = vunpack.c.h.b16 %v287
      %v366 = vunpack.c.l.b16 %v288
      %v367 = vunpack.c.h.b16 %v288
      %v368 = vunpack.c.l.b16 %v289
      %v369 = vunpack.c.h.b16 %v289
      %v370 = vunpack.c.l.b16 %v290
      %v371 = vunpack.c.h.b16 %v290
      %v372 = vunpack.c.l.b16 %v291
      %v373 = vunpack.c.h.b16 %v291
      %v374 = vunpack.c.l.b16 %v292
      %v375 = vunpack.c.h.b16 %v292
      %v376 = vpack.c.b16 %v330, %v328
      %v377 = vpack.c.b16 %v331, %v329
      %v378 = vpack.c.b16 %v334, %v332
      %v379 = vpack.c.b16 %v335, %v333
      %v380 = vpack.c.b16 %v338, %v336
      %v381 = vpack.c.b16 %v339, %v337
      %v382 = vpack.c.b16 %v342, %v340
      %v383 = vpack.c.b16 %v343, %v341
      %v384 = vpack.c.b16 %v346, %v344
      %v385 = vpack.c.b16 %v347, %v345
      %v386 = vpack.c.b16 %v350, %v348
      %v387 = vpack.c.b16 %v351, %v349
      %v388 = vpack.c.b16 %v354, %v352
      %v389 = vpack.c.b16 %v355, %v353
      %v390 = vpack.c.b16 %v358, %v356
      %v391 = vpack.c.b16 %v359, %v357
      %v392 = vpack.c.b16 %v362, %v360
      %v393 = vpack.c.b16 %v363, %v361
      %v394 = vpack.c.b16 %v366, %v364
      %v395 = vpack.c.b16 %v367, %v365
      %v396 = vpack.c.b16 %v370, %v368
      %v397 = vpack.c.b16 %v371, %v369
      %v398 = vpack.c.b16 %v374, %v372
      %v399 = vpack.c.b16 %v375, %v373
      %vm424 = vcmask 523264
      %v426 = vsel %vm424, %v265, 0
      %428 = vmatprep.subr.bf16.mxu0 %v391
      %429 = vmatpush1.bf16.msra.mxu0 %v390
      %430 = vmatprep.subr.bf16.mxu0 %v389
      %431 = vmatpush1.bf16.msra.mxu0 %v388
      %432 = vmatprep.subr.bf16.mxu0 %v387
      %433 = vmatpush1.bf16.msra.mxu0 %v386
      %434 = vmatprep.subr.bf16.mxu0 %v385
      %435 = vmatpush1.bf16.msra.mxu0 %v384
      %436 = vmatprep.subr.bf16.mxu0 %v383
      %437 = vmatpush1.bf16.msra.mxu0 %v382
      %438 = vmatprep.subr.bf16.mxu0 %v381
      %439 = vmatpush1.bf16.msra.mxu0 %v380
      %440 = vmatprep.subr.bf16.mxu0 %v379
      %441 = vmatpush1.bf16.msra.mxu0 %v378
      %442 = vmatprep.subr.bf16.mxu0 %v377
      %443 = vmatpush1.bf16.msra.mxu0 %v376
      %444 = vmatprep.subr.bf16.mxu0 0
      %445 = vmatpush2.bf16.msra.mxu0 0
      %446 = vmatprep.subr.bf16.mxu0 0
      %447 = vmatpush2.bf16.msra.mxu0 0
      %448 = vmatprep.subr.bf16.mxu0 0
      %449 = vmatpush2.bf16.msra.mxu0 0
      %450 = vmatprep.subr.bf16.mxu0 0
      %451 = vmatpush2.bf16.msra.mxu0 0
      %452 = vmatprep.subr.bf16.mxu0 %v399
      %453 = vmatpush2.bf16.msra.mxu0 %v398
      %454 = vmatprep.subr.bf16.mxu0 %v397
      %455 = vmatpush2.bf16.msra.mxu0 %v396
      %456 = vmatprep.subr.bf16.mxu0 %v395
      %457 = vmatpush2.bf16.msra.mxu0 %v394
      %458 = vmatprep.subr.bf16.mxu0 %v393
      %459 = vmatpush2.bf16.msra.mxu0 %v392
      %460 = vmatprep.mubr.bf16.mxu0 %v426
      %461 = vmatmul.mubr.bf16.gmra.mxu0 %v264
      %v462 = vpop.f32.mrf.mxu0
      %v463 = vadd.f32 %v297, %v462
      %v464 = vpop.f32.mrf.mxu0
      %v465 = vadd.f32 %v301, %v464
      %v466 = vpop.f32.mrf.mxu0
      %v467 = vadd.f32 %v297, %v466
      %v468 = vpop.f32.mrf.mxu0
      %v469 = vadd.f32 %v301, %v468
      %470 = vdwg.mxu0
      %v471 = vmax.f32 %v463, 0.0
      %v472 = vmax.f32 %v465, 0.0
      %v473 = vmax.f32 %v467, 0.0
      %v474 = vmax.f32 %v469, 0.0
      %v475 = vpack.c.bf16 %v473, %v471
      %v476 = vpack.c.bf16 %v474, %v472
      %v477 = vld [vmem:[%s2] sm:$0xff]
      %v478 = vld [vmem:[%s2 + $0x8] sm:$0xff]
      %v479 = vld [vmem:[%s2 + $0x10] sm:$0xff]
      %v480 = vld [vmem:[%s2 + $0x18] sm:$0xff]
      %v481 = vld [vmem:[%s2 + $0x20] sm:$0xff]
      %v482 = vld [vmem:[%s2 + $0x28] sm:$0xff]
      %v483 = vld [vmem:[%s2 + $0x30] sm:$0xff]
      %v484 = vld [vmem:[%s2 + $0x38] sm:$0xff]
      %v485 = vld [vmem:[%s2 + $0x40] sm:$0xff]
      %v486 = vld [vmem:[%s2 + $0x48] sm:$0xff]
      %v487 = vld [vmem:[%s2 + $0x50] sm:$0xff]
      %v488 = vld [vmem:[%s2 + $0x58] sm:$0xff]
      %v489 = vld [vmem:[%s2 + $0x60] sm:$0xff]
      %v490 = vld [vmem:[%s2 + $0x68] sm:$0xff]
      %v491 = vld [vmem:[%s2 + $0x70] sm:$0xff]
      %v492 = vld [vmem:[%s2 + $0x78] sm:$0xff]
      %v493 = vld [vmem:[%s2 + $0x80] sm:$0xff]
      %v494 = vld [vmem:[%s2 + $0x88] sm:$0xff]
      %v495 = vld [vmem:[%s2 + $0x90] sm:$0xff]
      %v496 = vld [vmem:[%s2 + $0x98] sm:$0xff]
      %v497 = vld [vmem:[%s2 + $0xa0] sm:$0xff]
      %v498 = vld [vmem:[%s2 + $0xa8] sm:$0xff]
      %v499 = vld [vmem:[%s2 + $0xb0] sm:$0xff]
      %v500 = vld [vmem:[%s2 + $0xb8] sm:$0xff]
      %v501 = vld [vmem:[%s2 + $0xc0] sm:$0xff]
      %v502 = vld [vmem:[%s2 + $0xc8] sm:$0xff]
      %v503 = vld [vmem:[%s2 + $0xd0] sm:$0xff]
      %v504 = vld [vmem:[%s2 + $0xd8] sm:$0xff]
      %v505 = vld [vmem:[%s2 + $0xe0] sm:$0xff]
      %v506 = vld [vmem:[%s2 + $0xe8] sm:$0xff]
      %v507 = vld [vmem:[%s2 + $0xf0] sm:$0xff]
      %v508 = vld [vmem:[%s2 + $0xf8] sm:$0xff]
      %v510 = vlaneseq
      %v511 = vshrl.u32 %v510, 7
      %v512 = vsub.s32 0, %v511
      %v513 = vrot.slane %v268, %v512
      %v514 = vlaneseq
      %v515 = vshrl.u32 %v514, 7
      %v516 = vsub.s32 1, %v515
      %v517 = vrot.slane %v268, %v516
      %v552 = vunpack.c.l.b16 %v477
      %v553 = vunpack.c.h.b16 %v477
      %v554 = vunpack.c.l.b16 %v478
      %v555 = vunpack.c.h.b16 %v478
      %v556 = vunpack.c.l.b16 %v479
      %v557 = vunpack.c.h.b16 %v479
      %v558 = vunpack.c.l.b16 %v480
      %v559 = vunpack.c.h.b16 %v480
      %v560 = vunpack.c.l.b16 %v481
      %v561 = vunpack.c.h.b16 %v481
      %v562 = vunpack.c.l.b16 %v482
      %v563 = vunpack.c.h.b16 %v482
      %v564 = vunpack.c.l.b16 %v483
      %v565 = vunpack.c.h.b16 %v483
      %v566 = vunpack.c.l.b16 %v484
      %v567 = vunpack.c.h.b16 %v484
      %v568 = vunpack.c.l.b16 %v485
      %v569 = vunpack.c.h.b16 %v485
      %v570 = vunpack.c.l.b16 %v486
      %v571 = vunpack.c.h.b16 %v486
      %v572 = vunpack.c.l.b16 %v487
      %v573 = vunpack.c.h.b16 %v487
      %v574 = vunpack.c.l.b16 %v488
      %v575 = vunpack.c.h.b16 %v488
      %v576 = vunpack.c.l.b16 %v489
      %v577 = vunpack.c.h.b16 %v489
      %v578 = vunpack.c.l.b16 %v490
      %v579 = vunpack.c.h.b16 %v490
      %v580 = vunpack.c.l.b16 %v491
      %v581 = vunpack.c.h.b16 %v491
      %v582 = vunpack.c.l.b16 %v492
      %v583 = vunpack.c.h.b16 %v492
      %v584 = vunpack.c.l.b16 %v493
      %v585 = vunpack.c.h.b16 %v493
      %v586 = vunpack.c.l.b16 %v494
      %v587 = vunpack.c.h.b16 %v494
      %v588 = vunpack.c.l.b16 %v495
      %v589 = vunpack.c.h.b16 %v495
      %v590 = vunpack.c.l.b16 %v496
      %v591 = vunpack.c.h.b16 %v496
      %v592 = vunpack.c.l.b16 %v497
      %v593 = vunpack.c.h.b16 %v497
      %v594 = vunpack.c.l.b16 %v498
      %v595 = vunpack.c.h.b16 %v498
      %v596 = vunpack.c.l.b16 %v499
      %v597 = vunpack.c.h.b16 %v499
      %v598 = vunpack.c.l.b16 %v500
      %v599 = vunpack.c.h.b16 %v500
      %v600 = vunpack.c.l.b16 %v501
      %v601 = vunpack.c.h.b16 %v501
      %v602 = vunpack.c.l.b16 %v502
      %v603 = vunpack.c.h.b16 %v502
      %v604 = vunpack.c.l.b16 %v503
      %v605 = vunpack.c.h.b16 %v503
      %v606 = vunpack.c.l.b16 %v504
      %v607 = vunpack.c.h.b16 %v504
      %v608 = vunpack.c.l.b16 %v505
      %v609 = vunpack.c.h.b16 %v505
      %v610 = vunpack.c.l.b16 %v506
      %v611 = vunpack.c.h.b16 %v506
      %v612 = vunpack.c.l.b16 %v507
      %v613 = vunpack.c.h.b16 %v507
      %v614 = vunpack.c.l.b16 %v508
      %v615 = vunpack.c.h.b16 %v508
      %v616 = vpack.c.b16 %v554, %v552
      %v617 = vpack.c.b16 %v555, %v553
      %v618 = vpack.c.b16 %v558, %v556
      %v619 = vpack.c.b16 %v559, %v557
      %v620 = vpack.c.b16 %v562, %v560
      %v621 = vpack.c.b16 %v563, %v561
      %v622 = vpack.c.b16 %v566, %v564
      %v623 = vpack.c.b16 %v567, %v565
      %v624 = vpack.c.b16 %v570, %v568
      %v625 = vpack.c.b16 %v571, %v569
      %v626 = vpack.c.b16 %v574, %v572
      %v627 = vpack.c.b16 %v575, %v573
      %v628 = vpack.c.b16 %v578, %v576
      %v629 = vpack.c.b16 %v579, %v577
      %v630 = vpack.c.b16 %v582, %v580
      %v631 = vpack.c.b16 %v583, %v581
      %v632 = vpack.c.b16 %v586, %v584
      %v633 = vpack.c.b16 %v587, %v585
      %v634 = vpack.c.b16 %v590, %v588
      %v635 = vpack.c.b16 %v591, %v589
      %v636 = vpack.c.b16 %v594, %v592
      %v637 = vpack.c.b16 %v595, %v593
      %v638 = vpack.c.b16 %v598, %v596
      %v639 = vpack.c.b16 %v599, %v597
      %v640 = vpack.c.b16 %v602, %v600
      %v641 = vpack.c.b16 %v603, %v601
      %v642 = vpack.c.b16 %v606, %v604
      %v643 = vpack.c.b16 %v607, %v605
      %v644 = vpack.c.b16 %v610, %v608
      %v645 = vpack.c.b16 %v611, %v609
      %v646 = vpack.c.b16 %v614, %v612
      %v647 = vpack.c.b16 %v615, %v613
      %680 = vmatprep.subr.bf16.mxu0 %v631
      %681 = vmatpush1.bf16.msra.mxu0 %v630
      %682 = vmatprep.subr.bf16.mxu0 %v629
      %683 = vmatpush1.bf16.msra.mxu0 %v628
      %684 = vmatprep.subr.bf16.mxu0 %v627
      %685 = vmatpush1.bf16.msra.mxu0 %v626
      %686 = vmatprep.subr.bf16.mxu0 %v625
      %687 = vmatpush1.bf16.msra.mxu0 %v624
      %688 = vmatprep.subr.bf16.mxu0 %v623
      %689 = vmatpush1.bf16.msra.mxu0 %v622
      %690 = vmatprep.subr.bf16.mxu0 %v621
      %691 = vmatpush1.bf16.msra.mxu0 %v620
      %692 = vmatprep.subr.bf16.mxu0 %v619
      %693 = vmatpush1.bf16.msra.mxu0 %v618
      %694 = vmatprep.subr.bf16.mxu0 %v617
      %695 = vmatpush1.bf16.msra.mxu0 %v616
      %696 = vmatprep.subr.bf16.mxu0 %v647
      %697 = vmatpush2.bf16.msra.mxu0 %v646
      %698 = vmatprep.subr.bf16.mxu0 %v645
      %699 = vmatpush2.bf16.msra.mxu0 %v644
      %700 = vmatprep.subr.bf16.mxu0 %v643
      %701 = vmatpush2.bf16.msra.mxu0 %v642
      %702 = vmatprep.subr.bf16.mxu0 %v641
      %703 = vmatpush2.bf16.msra.mxu0 %v640
      %704 = vmatprep.subr.bf16.mxu0 %v639
      %705 = vmatpush2.bf16.msra.mxu0 %v638
      %706 = vmatprep.subr.bf16.mxu0 %v637
      %707 = vmatpush2.bf16.msra.mxu0 %v636
      %708 = vmatprep.subr.bf16.mxu0 %v635
      %709 = vmatpush2.bf16.msra.mxu0 %v634
      %710 = vmatprep.subr.bf16.mxu0 %v633
      %711 = vmatpush2.bf16.msra.mxu0 %v632
      %712 = vmatprep.mubr.bf16.mxu0 %v476
      %713 = vmatmul.mubr.bf16.gmra.mxu0 %v475
      %v714 = vpop.f32.mrf.mxu0
      %v715 = vadd.f32 %v513, %v714
      %v716 = vpop.f32.mrf.mxu0
      %v717 = vadd.f32 %v517, %v716
      %v718 = vpop.f32.mrf.mxu0
      %v719 = vadd.f32 %v513, %v718
      %v720 = vpop.f32.mrf.mxu0
      %v721 = vadd.f32 %v517, %v720
      %722 = vdwg.mxu0
      %v723 = vmax.f32 %v715, 0.0
      %v724 = vmax.f32 %v717, 0.0
      %v725 = vmax.f32 %v719, 0.0
      %v726 = vmax.f32 %v721, 0.0
      %v727 = vpack.c.bf16 %v725, %v723
      %v728 = vpack.c.bf16 %v726, %v724
      %v729 = vld [vmem:[%s3] sm:$0xf]
      %v730 = vld [vmem:[%s3 + $0x4] sm:$0xf]
      %v731 = vld [vmem:[%s3 + $0x8] sm:$0xf]
      %v732 = vld [vmem:[%s3 + $0xc] sm:$0xf]
      %v733 = vld [vmem:[%s3 + $0x10] sm:$0xf]
      %v734 = vld [vmem:[%s3 + $0x14] sm:$0xf]
      %v735 = vld [vmem:[%s3 + $0x18] sm:$0xf]
      %v736 = vld [vmem:[%s3 + $0x1c] sm:$0xf]
      %v737 = vld [vmem:[%s3 + $0x20] sm:$0xf]
      %v738 = vld [vmem:[%s3 + $0x24] sm:$0xf]
      %v739 = vld [vmem:[%s3 + $0x28] sm:$0xf]
      %v740 = vld [vmem:[%s3 + $0x2c] sm:$0xf]
      %v741 = vld [vmem:[%s3 + $0x30] sm:$0xf]
      %v742 = vld [vmem:[%s3 + $0x34] sm:$0xf]
      %v743 = vld [vmem:[%s3 + $0x38] sm:$0xf]
      %v744 = vld [vmem:[%s3 + $0x3c] sm:$0xf]
      %v745 = vld [vmem:[%s3 + $0x40] sm:$0xf]
      %v746 = vld [vmem:[%s3 + $0x44] sm:$0xf]
      %v747 = vld [vmem:[%s3 + $0x48] sm:$0xf]
      %v748 = vld [vmem:[%s3 + $0x4c] sm:$0xf]
      %v749 = vld [vmem:[%s3 + $0x50] sm:$0xf]
      %v750 = vld [vmem:[%s3 + $0x54] sm:$0xf]
      %v751 = vld [vmem:[%s3 + $0x58] sm:$0xf]
      %v752 = vld [vmem:[%s3 + $0x5c] sm:$0xf]
      %v753 = vld [vmem:[%s3 + $0x60] sm:$0xf]
      %v754 = vld [vmem:[%s3 + $0x64] sm:$0xf]
      %v755 = vld [vmem:[%s3 + $0x68] sm:$0xf]
      %v756 = vld [vmem:[%s3 + $0x6c] sm:$0xf]
      %v757 = vld [vmem:[%s3 + $0x70] sm:$0xf]
      %v758 = vld [vmem:[%s3 + $0x74] sm:$0xf]
      %v759 = vld [vmem:[%s3 + $0x78] sm:$0xf]
      %v760 = vld [vmem:[%s3 + $0x7c] sm:$0xf]
      %s761 = sld [smem:[#allocation2]]
      %v762 = vstv %s761
      %v795 = vunpack.c.l.b16 %v729
      %v796 = vunpack.c.l.b16 %v730
      %v797 = vunpack.c.l.b16 %v731
      %v798 = vunpack.c.l.b16 %v732
      %v799 = vunpack.c.l.b16 %v733
      %v800 = vunpack.c.l.b16 %v734
      %v801 = vunpack.c.l.b16 %v735
      %v802 = vunpack.c.l.b16 %v736
      %v803 = vunpack.c.l.b16 %v737
      %v804 = vunpack.c.l.b16 %v738
      %v805 = vunpack.c.l.b16 %v739
      %v806 = vunpack.c.l.b16 %v740
      %v807 = vunpack.c.l.b16 %v741
      %v808 = vunpack.c.l.b16 %v742
      %v809 = vunpack.c.l.b16 %v743
      %v810 = vunpack.c.l.b16 %v744
      %v811 = vunpack.c.l.b16 %v745
      %v812 = vunpack.c.l.b16 %v746
      %v813 = vunpack.c.l.b16 %v747
      %v814 = vunpack.c.l.b16 %v748
      %v815 = vunpack.c.l.b16 %v749
      %v816 = vunpack.c.l.b16 %v750
      %v817 = vunpack.c.l.b16 %v751
      %v818 = vunpack.c.l.b16 %v752
      %v819 = vunpack.c.l.b16 %v753
      %v820 = vunpack.c.l.b16 %v754
      %v821 = vunpack.c.l.b16 %v755
      %v822 = vunpack.c.l.b16 %v756
      %v823 = vunpack.c.l.b16 %v757
      %v824 = vunpack.c.l.b16 %v758
      %v825 = vunpack.c.l.b16 %v759
      %v826 = vunpack.c.l.b16 %v760
      %v827 = vpack.c.b16 %v796, %v795
      %v828 = vpack.c.b16 %v798, %v797
      %v829 = vpack.c.b16 %v800, %v799
      %v830 = vpack.c.b16 %v802, %v801
      %v831 = vpack.c.b16 %v804, %v803
      %v832 = vpack.c.b16 %v806, %v805
      %v833 = vpack.c.b16 %v808, %v807
      %v834 = vpack.c.b16 %v810, %v809
      %v835 = vpack.c.b16 %v812, %v811
      %v836 = vpack.c.b16 %v814, %v813
      %v837 = vpack.c.b16 %v816, %v815
      %v838 = vpack.c.b16 %v818, %v817
      %v839 = vpack.c.b16 %v820, %v819
      %v840 = vpack.c.b16 %v822, %v821
      %v841 = vpack.c.b16 %v824, %v823
      %v842 = vpack.c.b16 %v826, %v825
      %859 = vmatprep.subr.bf16.mxu0 0
      %860 = vmatpush1.bf16.msra.mxu0 %v834
      %861 = vmatprep.subr.bf16.mxu0 0
      %862 = vmatpush1.bf16.msra.mxu0 %v833
      %863 = vmatprep.subr.bf16.mxu0 0
      %864 = vmatpush1.bf16.msra.mxu0 %v832
      %865 = vmatprep.subr.bf16.mxu0 0
      %866 = vmatpush1.bf16.msra.mxu0 %v831
      %867 = vmatprep.subr.bf16.mxu0 0
      %868 = vmatpush1.bf16.msra.mxu0 %v830
      %869 = vmatprep.subr.bf16.mxu0 0
      %870 = vmatpush1.bf16.msra.mxu0 %v829
      %871 = vmatprep.subr.bf16.mxu0 0
      %872 = vmatpush1.bf16.msra.mxu0 %v828
      %873 = vmatprep.subr.bf16.mxu0 0
      %874 = vmatpush1.bf16.msra.mxu0 %v827
      %875 = vmatprep.subr.bf16.mxu0 0
      %876 = vmatpush2.bf16.msra.mxu0 %v842
      %877 = vmatprep.subr.bf16.mxu0 0
      %878 = vmatpush2.bf16.msra.mxu0 %v841
      %879 = vmatprep.subr.bf16.mxu0 0
      %880 = vmatpush2.bf16.msra.mxu0 %v840
      %881 = vmatprep.subr.bf16.mxu0 0
      %882 = vmatpush2.bf16.msra.mxu0 %v839
      %883 = vmatprep.subr.bf16.mxu0 0
      %884 = vmatpush2.bf16.msra.mxu0 %v838
      %885 = vmatprep.subr.bf16.mxu0 0
      %886 = vmatpush2.bf16.msra.mxu0 %v837
      %887 = vmatprep.subr.bf16.mxu0 0
      %888 = vmatpush2.bf16.msra.mxu0 %v836
      %889 = vmatprep.subr.bf16.mxu0 0
      %890 = vmatpush2.bf16.msra.mxu0 %v835
      %891 = vmatprep.mubr.bf16.mxu0 %v728
      %892 = vmatmul.mubr.bf16.gmra.mxu0 %v727
      %v893 = vpop.f32.mrf.mxu0
      %v894 = vadd.f32 %v762, %v893
      %v895 = vpop.f32.mrf.mxu0
      %v896 = vpop.f32.mrf.mxu0
      %v897 = vadd.f32 %v762, %v896
      %v898 = vpop.f32.mrf.mxu0
      %899 = vdwg.mxu0
      %vm900 = vcmask 64512
      %901 = vst.msk [vmem:[%s257] sm:$0xff] %vm900, %v894
      %902 = vst.msk [vmem:[%s257 + $0x8] sm:$0xff] %vm900, %v897
      %s903 = smul.u32 2, %s18
      %p904 = scmp.lt.s32.totalorder %s903, 3
      %s905 = scalar_select %p904, %s903, 3
      %s906 = smul.addr %s905, 8
      %s907 = scalar_lea.vmem %s6, %s906
      // Predicated region
      $region45: #{a2c_value_forward.1} parent=43 // pred_check
        %p908 = pneg %p167
      $region46: #{a2c_value_forward.1} parent=43 // pred_check_branch
        %910 = sbr.rel (%p908) target = $region48
      $region47: #{a2c_value_forward.1} parent=43 // pred_region
        %s911 = smul.u32 2, %s18
      $region48: #{a2c_value_forward.1} parent=43 // pred_fallthru
        _
    $region44: #{a2c_value_forward.1} parent=5 // pred_fallthru
      _
    %p912 = scmp.le.s32.totalorder 2, %s13
    // Predicated region
    $region49: #{a2c_value_forward.1} parent=5 // pred_check
      %p913 = pneg %p912
    $region50: #{a2c_value_forward.1} parent=5 // pred_check_branch
      %915 = sbr.rel (%p913) target = $region52
    $region51: #{a2c_value_forward.1} parent=5 // pred_region
      %s916 = ssub.s32 %s13, 2
      // Predicated region
      $region53: #{a2c_value_forward.1} parent=51 // pred_check
        %p917 = pneg %p173
      $region54: #{a2c_value_forward.1} parent=51 // pred_check_branch
        %919 = sbr.rel (%p917) target = $region56
      $region55: #{a2c_value_forward.1} parent=51 // pred_region
        %s920 = smul.u32 2, %s19
        %p921 = scmp.lt.s32.totalorder %s920, 3
        %s922 = scalar_select %p921, %s920, 3
        %s923 = smul.addr %s922, 8
        %s924 = scalar_lea.vmem %s6, %s923
      $region56: #{a2c_value_forward.1} parent=51 // pred_fallthru
        _
    $region52: #{a2c_value_forward.1} parent=5 // pred_fallthru
      _
  $region6: #{a2c_value_forward.1} parent=0 // loop_footer
    %s17 = sadd.s32 1, %s13
  $region7: #{a2c_value_forward.1} parent=0 // loop_footer_branch
    %12 = sbr.rel target = $region3
  $region8: #{a2c_value_forward.1} parent=0 // loop_exit
    _

</llo_original>
